<compile_context>
chip_gen: v7x
topology: tpu7x:2x2x1
jax: 0.10.0
libtpu: 0.0.40
codegen_flags: <defaults>
</compile_context>

<pallas_src>
import functools

import jax
import jax.numpy as jnp
from jax.experimental import pallas as pl
from jax.experimental.pallas import tpu as pltpu

# ---- small, module-consistent shapes ----------------------------------------
BATCH = 2
SEQ = 8
IN_FEAT = 64        # C1 (input_feat_size)
OUT_FEAT = 32       # C2 (output_feat_size)
LN_EPS = 1e-12      # matches nn.LayerNorm(eps=1e-12) in FeatureResizer


def feature_resizer_kernel(x_ref, w_ref, pgb_ref, o_ref):
    """x_ref: (TM, C1), w_ref: (C1, C2), pgb_ref: (3, C2) = [bias; gamma; beta]."""
    x = x_ref[...]                       # (TM, C1)
    w = w_ref[...]                       # (C1, C2)
    bias = pgb_ref[0:1, :]               # (1, C2) — static slices, no extra DMA
    gamma = pgb_ref[1:2, :]
    beta = pgb_ref[2:3, :]

    # Linear (f32 accumulation on the MXU)
    h = jnp.dot(x, w, preferred_element_type=jnp.float32) + bias   # (TM, C2)

    # LayerNorm over the feature axis (biased variance, like nn.LayerNorm)
    mean = jnp.mean(h, axis=-1, keepdims=True)
    centered = h - mean
    var = jnp.mean(centered * centered, axis=-1, keepdims=True)
    y = centered * jax.lax.rsqrt(var + LN_EPS) * gamma + beta

    # TODO(synk): dropout is eval-mode identity (inference semantics only).
    o_ref[...] = y.astype(o_ref.dtype)


def _round_up(x, m):
    return (x + m - 1) // m * m


@functools.partial(jax.jit, static_argnames=("block_rows",))
def feature_resizer(encoder_features, w, bias, gamma, beta, *, block_rows=1024):
    """encoder_features: (..., C1) float32 -> (..., C2) float32."""
    lead_shape = encoder_features.shape[:-1]
    c1 = encoder_features.shape[-1]
    c2 = w.shape[-1]

    x_flat = encoder_features.reshape(-1, c1)          # (N, C1) slab
    n = x_flat.shape[0]

    # Row tile: >=512 rows reaches ~85% of HBM roofline for big N; shrink and
    # 8-align for tiny inputs.  Pad N up to a tile multiple (padded rows are
    # sliced off after the call).
    tm = min(block_rows, _round_up(n, 8))
    n_pad = _round_up(n, tm)
    if n_pad != n:
        x_flat = jnp.pad(x_flat, ((0, n_pad - n), (0, 0)))

    # Pack the three tiny (C2,) vectors into one contiguous (3, C2) input.
    pgb = jnp.stack([bias, gamma, beta], axis=0)        # (3, C2)

    out = pl.pallas_call(
        feature_resizer_kernel,
        out_shape=jax.ShapeDtypeStruct((n_pad, c2), jnp.float32),
        grid=(n_pad // tm,),
        in_specs=[
            pl.BlockSpec((tm, c1), lambda i: (i, 0)),   # streamed x rows
            pl.BlockSpec((c1, c2), lambda i: (0, 0)),   # weight, stays in VMEM
            pl.BlockSpec((3, c2), lambda i: (0, 0)),    # packed bias/gamma/beta
        ],
        out_specs=pl.BlockSpec((tm, c2), lambda i: (i, 0)),
        compiler_params=pltpu.CompilerParams(
            dimension_semantics=("parallel",),
        ),
    )(x_flat, w, pgb)

    if n_pad != n:
        out = out[:n]
    return out.reshape(*lead_shape, c2)


# ----------------------------- pure-JAX reference ----------------------------
def reference_forward(encoder_features, w, bias, gamma, beta):
    h = encoder_features @ w + bias
    mean = jnp.mean(h, axis=-1, keepdims=True)
    var = jnp.mean((h - mean) ** 2, axis=-1, keepdims=True)
    y = (h - mean) / jnp.sqrt(var + LN_EPS) * gamma + beta
    return y  # dropout: identity at eval


# ----------------------------- parameter init --------------------------------
def init_params(key):
    kw, kb = jax.random.split(key, 2)
    # Weight stored pre-transposed as (C1, C2) so the kernel does x @ W.
    w = (0.1 * jax.random.normal(kw, (IN_FEAT, OUT_FEAT))).astype(jnp.float32)
    bias = (0.1 * jax.random.normal(kb, (OUT_FEAT,))).astype(jnp.float32)
    gamma = jnp.ones((OUT_FEAT,), jnp.float32)
    beta = jnp.zeros((OUT_FEAT,), jnp.float32)
    return w, bias, gamma, beta


if __name__ == "__main__":
    key = jax.random.PRNGKey(0)
    k_x, k_p, k_x2 = jax.random.split(key, 3)

    w, bias, gamma, beta = init_params(k_p)

    # Small module-consistent shapes (single grid step).
    x = jax.random.normal(k_x, (BATCH, SEQ, IN_FEAT), dtype=jnp.float32)
    out = feature_resizer(x, w, bias, gamma, beta)
    out = jax.block_until_ready(out)
    ref = reference_forward(x, w, bias, gamma, beta)
    assert out.shape == (BATCH, SEQ, OUT_FEAT)
    assert jnp.allclose(out, ref, atol=1e-5, rtol=1e-5), "mismatch vs reference"

    # Multi-step grid + row padding path (N not a multiple of the row tile).
    x2 = jax.random.normal(k_x2, (4, 600, IN_FEAT), dtype=jnp.float32)
    out2 = feature_resizer(x2, w, bias, gamma, beta, block_rows=512)
    out2 = jax.block_until_ready(out2)
    ref2 = reference_forward(x2, w, bias, gamma, beta)
    assert out2.shape == (4, 600, OUT_FEAT)
    assert jnp.allclose(out2, ref2, atol=1e-5, rtol=1e-5), "mismatch (tiled) vs reference"

    print("KERNEL_OK")
</pallas_src>

<mosaic_0001>
module attributes {stable_mosaic.version = 11 : i64} {
  func.func @feature_resizer_kernel(%arg0: i32, %arg1: memref<16x64xf32, #tpu.memory_space<vmem>>, %arg2: memref<64x32xf32, #tpu.memory_space<vmem>>, %arg3: memref<3x32xf32, #tpu.memory_space<vmem>>, %arg4: memref<16x32xf32, #tpu.memory_space<vmem>>) attributes {dimension_semantics = [#tpu.dimension_semantics<parallel>], iteration_bounds = array<i64: 1>, scalar_prefetch = 0 : i64, scratch_operands = 0 : i64, tpu.core_type = #tpu.core_type<tc>, window_params = [{transform_indices = @transform_0, window_bounds = array<i64: 16, 64>}, {pipeline_mode = #tpu.pipeline_mode<synchronous>, transform_indices = @transform_1, window_bounds = array<i64: 64, 32>}, {pipeline_mode = #tpu.pipeline_mode<synchronous>, transform_indices = @transform_2, window_bounds = array<i64: 3, 32>}, {transform_indices = @transform_3, window_bounds = array<i64: 16, 32>}]} {
    %c0 = arith.constant 0 : index
    %c0_0 = arith.constant 0 : index
    %0 = vector.load %arg1[%c0, %c0_0] : memref<16x64xf32, #tpu.memory_space<vmem>>, vector<16x64xf32>
    %c0_1 = arith.constant 0 : index
    %c0_2 = arith.constant 0 : index
    %1 = vector.load %arg2[%c0_1, %c0_2] : memref<64x32xf32, #tpu.memory_space<vmem>>, vector<64x32xf32>
    %c0_3 = arith.constant 0 : index
    %c0_4 = arith.constant 0 : index
    %2 = vector.load %arg3[%c0_3, %c0_4] : memref<3x32xf32, #tpu.memory_space<vmem>>, vector<1x32xf32>
    %c1 = arith.constant 1 : index
    %c0_5 = arith.constant 0 : index
    %3 = vector.load %arg3[%c1, %c0_5] : memref<3x32xf32, #tpu.memory_space<vmem>>, vector<1x32xf32>
    %c2 = arith.constant 2 : index
    %c0_6 = arith.constant 0 : index
    %4 = vector.load %arg3[%c2, %c0_6] : memref<3x32xf32, #tpu.memory_space<vmem>>, vector<1x32xf32>
    %cst = arith.constant dense<0.000000e+00> : vector<16x32xf32>
    %5 = tpu.matmul %0, %1, %cst {dimension_numbers = #tpu.dot_dimension_numbers<[1], [0], [0], [1], [0, 0, 1, 1], [], []>} : vector<16x64xf32>, vector<64x32xf32>, vector<16x32xf32> -> vector<16x32xf32>
    %6 = vector.broadcast %2 : vector<1x32xf32> to vector<16x32xf32>
    %7 = arith.addf %5, %6 : vector<16x32xf32>
    %cst_7 = arith.constant dense<0.000000e+00> : vector<16xf32>
    %8 = vector.multi_reduction <add>, %7, %cst_7 [1] : vector<16x32xf32> to vector<16xf32>
    %9 = vector.shape_cast %8 : vector<16xf32> to vector<16x1xf32>
    %cst_8 = arith.constant 3.200000e+01 : f32
    %10 = vector.broadcast %cst_8 : f32 to vector<16x1xf32>
    %11 = arith.divf %9, %10 : vector<16x1xf32>
    %12 = vector.broadcast %11 : vector<16x1xf32> to vector<16x32xf32>
    %13 = arith.subf %7, %12 : vector<16x32xf32>
    %14 = arith.mulf %13, %13 : vector<16x32xf32>
    %cst_9 = arith.constant dense<0.000000e+00> : vector<16xf32>
    %15 = vector.multi_reduction <add>, %14, %cst_9 [1] : vector<16x32xf32> to vector<16xf32>
    %16 = vector.shape_cast %15 : vector<16xf32> to vector<16x1xf32>
    %cst_10 = arith.constant 3.200000e+01 : f32
    %17 = vector.broadcast %cst_10 : f32 to vector<16x1xf32>
    %18 = arith.divf %16, %17 : vector<16x1xf32>
    %cst_11 = arith.constant 9.99999996E-13 : f32
    %19 = vector.broadcast %cst_11 : f32 to vector<16x1xf32>
    %20 = arith.addf %18, %19 : vector<16x1xf32>
    %21 = math.rsqrt %20 : vector<16x1xf32>
    %22 = vector.broadcast %21 : vector<16x1xf32> to vector<16x32xf32>
    %23 = arith.mulf %13, %22 : vector<16x32xf32>
    %24 = vector.broadcast %3 : vector<1x32xf32> to vector<16x32xf32>
    %25 = arith.mulf %23, %24 : vector<16x32xf32>
    %26 = vector.broadcast %4 : vector<1x32xf32> to vector<16x32xf32>
    %27 = arith.addf %25, %26 : vector<16x32xf32>
    %c0_12 = arith.constant 0 : index
    %c0_13 = arith.constant 0 : index
    %28 = vector.load %arg4[%c0_12, %c0_13] : memref<16x32xf32, #tpu.memory_space<vmem>>, vector<16x32xf32>
    tpu.vector_store %arg4[%c0_12, %c0_13], %27 {strides = array<i32>} : memref<16x32xf32, #tpu.memory_space<vmem>>, vector<16x32xf32>,
    return
  }
  func.func @transform_0(%arg0: i32) -> (i32, i32) {
    %c0_i32 = arith.constant 0 : i32
    %c0_i32_0 = arith.constant 0 : i32
    return %arg0, %c0_i32 : i32, i32
  }
  func.func @transform_1(%arg0: i32) -> (i32, i32) {
    %c0_i32 = arith.constant 0 : i32
    %c0_i32_0 = arith.constant 0 : i32
    %c0_i32_1 = arith.constant 0 : i32
    return %c0_i32, %c0_i32_0 : i32, i32
  }
  func.func @transform_2(%arg0: i32) -> (i32, i32) {
    %c0_i32 = arith.constant 0 : i32
    %c0_i32_0 = arith.constant 0 : i32
    %c0_i32_1 = arith.constant 0 : i32
    return %c0_i32, %c0_i32_0 : i32, i32
  }
  func.func @transform_3(%arg0: i32) -> (i32, i32) {
    %c0_i32 = arith.constant 0 : i32
    %c0_i32_0 = arith.constant 0 : i32
    return %arg0, %c0_i32 : i32, i32
  }
}

</mosaic_0001>

<llo_original>
// kernel: feature_resizer.1
$region0: #{feature_resizer.1}
  #allocation0 [shape = 'u32[]', space=smem, size = 0x4, offset = 0x4, fixed_abs, tag = 'smem constant byte address 0x4 - core index']
  #allocation1 [shape = 'u32[144,128]{1,0:T(1,128)}', space=vmem, size = 0x12000, scoped, tag = 'internal scratch']
  %s0 = inlined_call_operand.vmem [shape: f32[16,64], index: 0, kind: input, shape index: {}]
  %s1 = inlined_call_operand.vmem [shape: f32[64,32], index: 1, kind: input, shape index: {}]
  %s2 = inlined_call_operand.vmem [shape: f32[3,32], index: 2, kind: input, shape index: {}]
  %s3 = inlined_call_operand.hbm [shape: f32[16,32], index: 3, kind: output, shape index: {}]
  %s4 = sld [smem:[#allocation0]]
  $region22: #{feature_resizer.1} parent=0
    _
  %s6 = ssub.s32 1, %s4
  %s7 = scalar_select 0, %s6, %s4
  $region1: #{feature_resizer.1} parent=0
    #allocation2 [shape = 'u8[8192]{0}', space=vmem, size = 0x2000, scoped, tag = 'output window, operand 0, single buffered']
    #allocation3 [shape = 's32[1]{0}', space=sflag, size = 0x4, scoped, tag = 'scoped memory for feature_resizer.1']
    %8 = vsyncpa [#allocation3], 0
    // Predicated region
    $region2: #{feature_resizer.1} parent=1 // pred_check
      _
    $region3: #{feature_resizer.1} parent=1 // pred_check_branch
      %10 = sbr.rel (0) target = $region5
    $region4: #{feature_resizer.1} parent=1 // pred_region
      _
    $region5: #{feature_resizer.1} parent=1 // pred_fallthru
      _
    // Predicated region
    $region6: #{feature_resizer.1} parent=1 // pred_check
      _
    $region7: #{feature_resizer.1} parent=1 // pred_check_branch
      %12 = sbr.rel (0) target = $region9
    $region8: #{feature_resizer.1} parent=1 // pred_region
      _
    $region9: #{feature_resizer.1} parent=1 // pred_fallthru
      _
    // Predicated region
    $region10: #{feature_resizer.1} parent=1 // pred_check
      _
    $region11: #{feature_resizer.1} parent=1 // pred_check_branch
      %14 = sbr.rel (0) target = $region13
    $region12: #{feature_resizer.1} parent=1 // pred_region
      _
    $region13: #{feature_resizer.1} parent=1 // pred_fallthru
      _
    %v15 = vld [vmem:[%s0] sm:$0xff]
    %v16 = vld [vmem:[%s0 + $0x8] sm:$0xff]
    %v17 = vld [vmem:[%s1] sm:$0xff]
    %v18 = vld [vmem:[%s1 + $0x8] sm:$0xff]
    %v19 = vld [vmem:[%s1 + $0x10] sm:$0xff]
    %v20 = vld [vmem:[%s1 + $0x18] sm:$0xff]
    %v21 = vld [vmem:[%s1 + $0x20] sm:$0xff]
    %v22 = vld [vmem:[%s1 + $0x28] sm:$0xff]
    %v23 = vld [vmem:[%s1 + $0x30] sm:$0xff]
    %v24 = vld [vmem:[%s1 + $0x38] sm:$0xff]
    %v25 = vld [vmem:[%s2] sm:$0x1]
    %v26 = vld [vmem:[%s2 + $0x1] sm:$0x1]
    %v27 = vld [vmem:[%s2 + $0x2] sm:$0x1]
    %v28 = vlaneseq
    %v29 = vshrl.u32 %v28, 7
    %v30 = vsub.s32 0, %v29
    %v31 = vrot.slane %v25, %v30
    %vm32 = vcmask 523264
    %v34 = vsel %vm32, %v15, 0
    %v37 = vsel %vm32, %v16, 0
    %39 = vmatprep.subr.mxu0 0.0
    %40 = vmatpush1.msra.mxu0 %v17
    %41 = vmatprep.subr.mxu0 0.0
    %42 = vmatpush1.msra.mxu0 %v18
    %43 = vmatprep.subr.mxu0 0.0
    %44 = vmatpush1.msra.mxu0 %v19
    %45 = vmatprep.subr.mxu0 0.0
    %46 = vmatpush1.msra.mxu0 %v20
    %47 = vmatprep.subr.mxu0 0.0
    %48 = vmatpush1.msra.mxu0 %v21
    %49 = vmatprep.subr.mxu0 0.0
    %50 = vmatpush1.msra.mxu0 %v22
    %51 = vmatprep.subr.mxu0 0.0
    %52 = vmatpush1.msra.mxu0 %v23
    %53 = vmatprep.subr.mxu0 0.0
    %54 = vmatpush1.msra.mxu0 %v24
    %55 = vmatprep.subr.mxu0 0.0
    %56 = vmatpush1.msra.mxu0 0.0
    %57 = vmatprep.subr.mxu0 0.0
    %58 = vmatpush1.msra.mxu0 0.0
    %59 = vmatprep.subr.mxu0 0.0
    %60 = vmatpush1.msra.mxu0 0.0
    %61 = vmatprep.subr.mxu0 0.0
    %62 = vmatpush1.msra.mxu0 0.0
    %63 = vmatprep.subr.mxu0 0.0
    %64 = vmatpush1.msra.mxu0 0.0
    %65 = vmatprep.subr.mxu0 0.0
    %66 = vmatpush1.msra.mxu0 0.0
    %67 = vmatprep.subr.mxu0 0.0
    %68 = vmatpush1.msra.mxu0 0.0
    %69 = vmatprep.subr.mxu0 0.0
    %70 = vmatpush1.msra.mxu0 0.0
    %71 = vmatprep.subr.mxu0 0.0
    %72 = vmatpush1.msra.mxu0 0.0
    %73 = vmatprep.subr.mxu0 0.0
    %74 = vmatpush1.msra.mxu0 0.0
    %75 = vmatprep.subr.mxu0 0.0
    %76 = vmatpush1.msra.mxu0 0.0
    %77 = vmatprep.subr.mxu0 0.0
    %78 = vmatpush1.msra.mxu0 0.0
    %79 = vmatprep.subr.mxu0 0.0
    %80 = vmatpush1.msra.mxu0 0.0
    %81 = vmatprep.subr.mxu0 0.0
    %82 = vmatpush1.msra.mxu0 0.0
    %83 = vmatprep.subr.mxu0 0.0
    %84 = vmatpush1.msra.mxu0 0.0
    %85 = vmatprep.subr.mxu0 0.0
    %86 = vmatpush1.msra.mxu0 0.0
    %87 = vmatprep.subr.mxu0 0.0
    %88 = vmatpush1.msra.mxu0 0.0
    %89 = vmatprep.subr.mxu0 0.0
    %90 = vmatpush1.msra.mxu0 0.0
    %91 = vmatprep.subr.mxu0 0.0
    %92 = vmatpush1.msra.mxu0 0.0
    %93 = vmatprep.subr.mxu0 0.0
    %94 = vmatpush1.msra.mxu0 0.0
    %95 = vmatprep.subr.mxu0 0.0
    %96 = vmatpush1.msra.mxu0 0.0
    %97 = vmatprep.subr.mxu0 0.0
    %98 = vmatpush1.msra.mxu0 0.0
    %99 = vmatprep.subr.mxu0 0.0
    %100 = vmatpush1.msra.mxu0 0.0
    %101 = vmatprep.subr.mxu0 0.0
    %102 = vmatpush1.msra.mxu0 0.0
    %103 = vmatprep.mubr.f32.mxu0 0.0
    %104 = vmatmul.mubr.f32.gmra.mrb[0].mxu0 %v34
    %v105 = vpop.f32.mrb[0].mxu0
    %v106 = vadd.f32 %v31, %v105
    %v107 = vpop.f32.mrb[0].mxu0
    %108 = vmatprep.mubr.f32.mxu0 0.0
    %109 = vmatmul.mubr.f32.gmra.mrb[0].mxu0 %v37
    %v110 = vpop.f32.mrb[0].mxu0
    %v111 = vadd.f32 %v31, %v110
    %v112 = vpop.f32.mrb[0].mxu0
    %113 = vdwg.mxu0
    %vm114 = vcmask 261120
    %v115 = vsel %vm114, %v106, 0.0
    %116 = vadd.xlane.f32.xlu0 %v115
    %v117 = vpop.xlane.xlu0 %116
    %v118 = vsel %vm114, %v111, 0.0
    %119 = vadd.xlane.f32.xlu0 %v118
    %v120 = vpop.xlane.xlu0 %119
    %v121 = vrcp.pop 32.0
    %v122 = vmul.f32 %v117, %v121
    %v123 = vmul.f32 %v120, %v121
    %v124 = vsub.f32 %v106, %v122
    %v125 = vsub.f32 %v111, %v123
    %v126 = vmul.f32 %v124, %v124
    %v127 = vmul.f32 %v125, %v125
    %v128 = vsel %vm114, %v126, 0.0
    %129 = vadd.xlane.f32.xlu0 %v128
    %v130 = vpop.xlane.xlu0 %129
    %v131 = vsel %vm114, %v127, 0.0
    %132 = vadd.xlane.f32.xlu0 %v131
    %v133 = vpop.xlane.xlu0 %132
    %v134 = vmul.f32 %v130, %v121
    %v135 = vmul.f32 %v133, %v121
    %v136 = vadd.f32 %v134, 1e-12
    %v137 = vadd.f32 %v135, 1e-12
    %v138 = vrsqrt.pop %v136
    %v139 = vrsqrt.pop %v137
    %v140 = vmul.f32 %v124, %v138
    %v141 = vmul.f32 %v125, %v139
    %v142 = vlaneseq
    %v143 = vshrl.u32 %v142, 7
    %v144 = vsub.s32 0, %v143
    %v145 = vrot.slane %v26, %v144
    %v146 = vmul.f32 %v140, %v145
    %v147 = vmul.f32 %v141, %v145
    %v148 = vlaneseq
    %v149 = vshrl.u32 %v148, 7
    %v150 = vsub.s32 0, %v149
    %v151 = vrot.slane %v27, %v150
    %v152 = vadd.f32 %v146, %v151
    %v153 = vadd.f32 %v147, %v151
    %154 = vst.msk [vmem:[#allocation2] sm:$0xff] %vm114, %v152
    %155 = vst.msk [vmem:[#allocation2 + $0x8] sm:$0xff] %vm114, %v153
    // Predicated region
    $region14: #{feature_resizer.1} parent=1 // pred_check
      _
    $region15: #{feature_resizer.1} parent=1 // pred_check_branch
      %157 = sbr.rel (0) target = $region17
    $region16: #{feature_resizer.1} parent=1 // pred_region
      %s159 = ssub.s32 256, 256
      %160 = vsyncadd [#allocation3], %s159
      %s161 = sshll.u32 [#allocation2], 4
      %s162 = int_to_ptr.vmem [resolvable:$true] %s161
      %167 = dma.vmem_to_hbm [thread:$0]  %s162, 256, %s3, [#allocation3], 128, 128, 8
    $region17: #{feature_resizer.1} parent=1 // pred_fallthru
      _
    // Predicated region
    $region18: #{feature_resizer.1} parent=1 // pred_check
      _
    $region19: #{feature_resizer.1} parent=1 // pred_check_branch
      %169 = sbr.rel (0) target = $region21
    $region20: #{feature_resizer.1} parent=1 // pred_region
      %170 = dma.done [#allocation3], 256
    $region21: #{feature_resizer.1} parent=1 // pred_fallthru
      _
    %171 = vsyncpa [#allocation3], 1

</llo_original>
